<compile_context>
chip_gen: v6e
topology: v6e:2x2x1
jax: 0.10.0
libtpu: 0.0.40
codegen_flags: <defaults>
</compile_context>

<pallas_src>
import jax
import jax.numpy as jnp
from jax.experimental import pallas as pl
from jax.experimental.pallas import tpu as pltpu


def ar_kernel(x_ref, w_ref, b_ref, o_ref):
    # x_ref: (TB, W, TS) VMEM tile (input dtype)
    # w_ref: (1, W) f32 SMEM  -- weights read as scalars, splat-multiplied on VPU
    # b_ref: (1, 1) f32 SMEM  -- bias scalar
    # o_ref: (TB, TS)         -- lane/sublane-dense output block
    W = x_ref.shape[1]
    # Unrolled weighted accumulation over the (small, static) window axis.
    # Only ~2 (TB, TS) f32 values are live at a time, vs. a full-tile f32
    # upcast + broadcast product in the previous version.
    acc = x_ref[:, 0, :].astype(jnp.float32) * w_ref[0, 0]
    for wi in range(1, W):
        acc = acc + x_ref[:, wi, :].astype(jnp.float32) * w_ref[0, wi]
    o_ref[...] = (acc + b_ref[0, 0]).astype(o_ref.dtype)


def ar_forward(x, weight, bias):
    """x: (B, W, S), weight: (1, W), bias: (1,). Returns (B, 1, S)."""
    B, W, S = x.shape
    itemsize = jnp.dtype(x.dtype).itemsize
    out_itemsize = itemsize

    # Per-step VMEM footprint: double-buffered input block + double-buffered
    # output block + the in-kernel f32 accumulator and one live f32 temp.
    def tile_bytes(tb, ts):
        return (2 * tb * W * ts * itemsize      # input block (2-deep pipeline)
                + 2 * tb * ts * out_itemsize    # output block (2-deep pipeline)
                + 2 * tb * ts * 4)              # f32 accumulator + live temp

    # Conservative budget: safe on v7x (64 MiB VMEM / 32 MiB scoped default)
    # as well as v5e/v6e (128 MiB VMEM).
    budget = 24 * 1024 * 1024

    # Lane tile: prefer the whole S axis (one contiguous HBM DMA per step);
    # fall back to a 128-multiple tile only if a single full-S row slab does
    # not fit the budget. (If S is not a multiple of 128 the block constraint
    # forces the full axis anyway.)
    if S % 128 != 0 or tile_bytes(1, S) <= budget:
        TS = S
    else:
        max_ts = budget // (2 * W * itemsize + 2 * out_itemsize + 8)
        TS = max(128, (min(max_ts, S) // 128) * 128)

    # Batch tile: as many rows as fit the budget. When the block does not
    # cover the whole batch it must be sublane-dense (multiple of 8) for the
    # 2-D output block, and for large B it is capped so the batch grid axis
    # has >= 2 blocks (v7x has 2 TensorCores; both grid axes are "parallel").
    if B <= 8:
        TB = B
    else:
        TB = max(1, min(B, budget // max(1, tile_bytes(1, TS))))
        if B >= 16:
            TB = min(TB, pl.cdiv(B, 2))
        if TB < B:
            TB = max(8, (TB // 8) * 8)

    grid = (pl.cdiv(B, TB), pl.cdiv(S, TS))

    w_smem = weight.reshape(1, W).astype(jnp.float32)   # f32 scalar weights
    b_smem = bias.reshape(1, 1).astype(jnp.float32)     # f32 bias scalar

    out2d = pl.pallas_call(
        ar_kernel,
        out_shape=jax.ShapeDtypeStruct((B, S), x.dtype),
        grid_spec=pltpu.PrefetchScalarGridSpec(
            num_scalar_prefetch=0,
            grid=grid,
            in_specs=[
                pl.BlockSpec((TB, W, TS), lambda bi, si: (bi, 0, si)),
                pl.BlockSpec(memory_space=pltpu.MemorySpace.SMEM),  # weights
                pl.BlockSpec(memory_space=pltpu.MemorySpace.SMEM),  # bias
            ],
            out_specs=pl.BlockSpec((TB, TS), lambda bi, si: (bi, si)),
        ),
        compiler_params=pltpu.CompilerParams(
            dimension_semantics=("parallel", "parallel"),
            vmem_limit_bytes=32 * 1024 * 1024,
        ),
    )(x, w_smem, b_smem)

    # Free metadata reshape back to the PyTorch output layout (B, 1, S).
    return out2d.reshape(B, 1, S)


if __name__ == "__main__":
    key = jax.random.PRNGKey(0)
    kx, kw, kb = jax.random.split(key, 3)

    # Small shapes consistent with the module: batch=2, window=8, n_series=16
    B, W, S = 2, 8, 16
    x = jax.random.normal(kx, (B, W, S), dtype=jnp.float32)
    # nn.Linear(window, 1): weight (1, window), bias (1,)
    weight = jax.random.normal(kw, (1, W), dtype=jnp.float32) * 0.1
    bias = jax.random.normal(kb, (1,), dtype=jnp.float32) * 0.1

    out = jax.block_until_ready(ar_forward(x, weight, bias))

    # Pure-JAX reference of the PyTorch forward
    ref = (jnp.einsum("bws,w->bs", x, weight[0]) + bias[0])[:, None, :]
    assert out.shape == (B, 1, S), out.shape
    assert jnp.allclose(out, ref, atol=1e-5, rtol=1e-5), (
        f"max err {jnp.max(jnp.abs(out - ref))}")

    # bf16 input path: accumulation stays f32 in-kernel, output cast to bf16.
    x_bf16 = x.astype(jnp.bfloat16)
    out_bf16 = jax.block_until_ready(ar_forward(x_bf16, weight, bias))
    ref_bf16 = (jnp.einsum("bws,w->bs", x_bf16.astype(jnp.float32), weight[0])
                + bias[0])[:, None, :]
    assert out_bf16.shape == (B, 1, S)
    assert jnp.allclose(out_bf16.astype(jnp.float32), ref_bf16,
                        atol=2e-2, rtol=2e-2), (
        f"max err {jnp.max(jnp.abs(out_bf16.astype(jnp.float32) - ref_bf16))}")

    # Multi-block path: B=16 triggers TB=8 (two batch blocks, sublane-dense
    # output) with a full-S contiguous lane tile.
    B2, S2 = 16, 256
    x2 = jax.random.normal(kx, (B2, W, S2), dtype=jnp.float32)
    out2 = jax.block_until_ready(ar_forward(x2, weight, bias))
    ref2 = (jnp.einsum("bws,w->bs", x2, weight[0]) + bias[0])[:, None, :]
    assert out2.shape == (B2, 1, S2)
    assert jnp.allclose(out2, ref2, atol=1e-5, rtol=1e-5), (
        f"max err {jnp.max(jnp.abs(out2 - ref2))}")

    print("KERNEL_OK")
</pallas_src>

<mosaic_0001>
module attributes {stable_mosaic.version = 11 : i64} {
  func.func @ar_kernel(%arg0: i32, %arg1: i32, %arg2: memref<2x8x16xf32, #tpu.memory_space<vmem>>, %arg3: memref<1x8xf32, #tpu.memory_space<smem>>, %arg4: memref<1x1xf32, #tpu.memory_space<smem>>, %arg5: memref<2x16xf32, #tpu.memory_space<vmem>>) attributes {dimension_semantics = [#tpu.dimension_semantics<parallel>, #tpu.dimension_semantics<parallel>], iteration_bounds = array<i64: 1, 1>, scalar_prefetch = 0 : i64, scratch_operands = 0 : i64, tpu.core_type = #tpu.core_type<tc>, window_params = [{transform_indices = @transform_0, window_bounds = array<i64: 2, 8, 16>}, {transform_indices = @transform_1, window_bounds = array<i64: 1, 8>}, {transform_indices = @transform_2, window_bounds = array<i64: 1, 1>}, {transform_indices = @transform_3, window_bounds = array<i64: 2, 16>}]} {
    %c0 = arith.constant 0 : index
    %c0_0 = arith.constant 0 : index
    %c0_1 = arith.constant 0 : index
    %0 = vector.load %arg2[%c0, %c0_0, %c0_1] : memref<2x8x16xf32, #tpu.memory_space<vmem>>, vector<2x1x16xf32>
    %1 = vector.shape_cast %0 : vector<2x1x16xf32> to vector<2x16xf32>
    %c0_2 = arith.constant 0 : index
    %c0_3 = arith.constant 0 : index
    %2 = memref.load %arg3[%c0_2, %c0_3] : memref<1x8xf32, #tpu.memory_space<smem>>
    %3 = vector.broadcast %2 : f32 to vector<2x16xf32>
    %4 = arith.mulf %1, %3 : vector<2x16xf32>
    %c0_4 = arith.constant 0 : index
    %c1 = arith.constant 1 : index
    %c0_5 = arith.constant 0 : index
    %5 = vector.load %arg2[%c0_4, %c1, %c0_5] : memref<2x8x16xf32, #tpu.memory_space<vmem>>, vector<2x1x16xf32>
    %6 = vector.shape_cast %5 : vector<2x1x16xf32> to vector<2x16xf32>
    %c0_6 = arith.constant 0 : index
    %c1_7 = arith.constant 1 : index
    %7 = memref.load %arg3[%c0_6, %c1_7] : memref<1x8xf32, #tpu.memory_space<smem>>
    %8 = vector.broadcast %7 : f32 to vector<2x16xf32>
    %9 = arith.mulf %6, %8 : vector<2x16xf32>
    %10 = arith.addf %4, %9 : vector<2x16xf32>
    %c0_8 = arith.constant 0 : index
    %c2 = arith.constant 2 : index
    %c0_9 = arith.constant 0 : index
    %11 = vector.load %arg2[%c0_8, %c2, %c0_9] : memref<2x8x16xf32, #tpu.memory_space<vmem>>, vector<2x1x16xf32>
    %12 = vector.shape_cast %11 : vector<2x1x16xf32> to vector<2x16xf32>
    %c0_10 = arith.constant 0 : index
    %c2_11 = arith.constant 2 : index
    %13 = memref.load %arg3[%c0_10, %c2_11] : memref<1x8xf32, #tpu.memory_space<smem>>
    %14 = vector.broadcast %13 : f32 to vector<2x16xf32>
    %15 = arith.mulf %12, %14 : vector<2x16xf32>
    %16 = arith.addf %10, %15 : vector<2x16xf32>
    %c0_12 = arith.constant 0 : index
    %c3 = arith.constant 3 : index
    %c0_13 = arith.constant 0 : index
    %17 = vector.load %arg2[%c0_12, %c3, %c0_13] : memref<2x8x16xf32, #tpu.memory_space<vmem>>, vector<2x1x16xf32>
    %18 = vector.shape_cast %17 : vector<2x1x16xf32> to vector<2x16xf32>
    %c0_14 = arith.constant 0 : index
    %c3_15 = arith.constant 3 : index
    %19 = memref.load %arg3[%c0_14, %c3_15] : memref<1x8xf32, #tpu.memory_space<smem>>
    %20 = vector.broadcast %19 : f32 to vector<2x16xf32>
    %21 = arith.mulf %18, %20 : vector<2x16xf32>
    %22 = arith.addf %16, %21 : vector<2x16xf32>
    %c0_16 = arith.constant 0 : index
    %c4 = arith.constant 4 : index
    %c0_17 = arith.constant 0 : index
    %23 = vector.load %arg2[%c0_16, %c4, %c0_17] : memref<2x8x16xf32, #tpu.memory_space<vmem>>, vector<2x1x16xf32>
    %24 = vector.shape_cast %23 : vector<2x1x16xf32> to vector<2x16xf32>
    %c0_18 = arith.constant 0 : index
    %c4_19 = arith.constant 4 : index
    %25 = memref.load %arg3[%c0_18, %c4_19] : memref<1x8xf32, #tpu.memory_space<smem>>
    %26 = vector.broadcast %25 : f32 to vector<2x16xf32>
    %27 = arith.mulf %24, %26 : vector<2x16xf32>
    %28 = arith.addf %22, %27 : vector<2x16xf32>
    %c0_20 = arith.constant 0 : index
    %c5 = arith.constant 5 : index
    %c0_21 = arith.constant 0 : index
    %29 = vector.load %arg2[%c0_20, %c5, %c0_21] : memref<2x8x16xf32, #tpu.memory_space<vmem>>, vector<2x1x16xf32>
    %30 = vector.shape_cast %29 : vector<2x1x16xf32> to vector<2x16xf32>
    %c0_22 = arith.constant 0 : index
    %c5_23 = arith.constant 5 : index
    %31 = memref.load %arg3[%c0_22, %c5_23] : memref<1x8xf32, #tpu.memory_space<smem>>
    %32 = vector.broadcast %31 : f32 to vector<2x16xf32>
    %33 = arith.mulf %30, %32 : vector<2x16xf32>
    %34 = arith.addf %28, %33 : vector<2x16xf32>
    %c0_24 = arith.constant 0 : index
    %c6 = arith.constant 6 : index
    %c0_25 = arith.constant 0 : index
    %35 = vector.load %arg2[%c0_24, %c6, %c0_25] : memref<2x8x16xf32, #tpu.memory_space<vmem>>, vector<2x1x16xf32>
    %36 = vector.shape_cast %35 : vector<2x1x16xf32> to vector<2x16xf32>
    %c0_26 = arith.constant 0 : index
    %c6_27 = arith.constant 6 : index
    %37 = memref.load %arg3[%c0_26, %c6_27] : memref<1x8xf32, #tpu.memory_space<smem>>
    %38 = vector.broadcast %37 : f32 to vector<2x16xf32>
    %39 = arith.mulf %36, %38 : vector<2x16xf32>
    %40 = arith.addf %34, %39 : vector<2x16xf32>
    %c0_28 = arith.constant 0 : index
    %c7 = arith.constant 7 : index
    %c0_29 = arith.constant 0 : index
    %41 = vector.load %arg2[%c0_28, %c7, %c0_29] : memref<2x8x16xf32, #tpu.memory_space<vmem>>, vector<2x1x16xf32>
    %42 = vector.shape_cast %41 : vector<2x1x16xf32> to vector<2x16xf32>
    %c0_30 = arith.constant 0 : index
    %c7_31 = arith.constant 7 : index
    %43 = memref.load %arg3[%c0_30, %c7_31] : memref<1x8xf32, #tpu.memory_space<smem>>
    %44 = vector.broadcast %43 : f32 to vector<2x16xf32>
    %45 = arith.mulf %42, %44 : vector<2x16xf32>
    %46 = arith.addf %40, %45 : vector<2x16xf32>
    %c0_32 = arith.constant 0 : index
    %c0_33 = arith.constant 0 : index
    %47 = memref.load %arg4[%c0_32, %c0_33] : memref<1x1xf32, #tpu.memory_space<smem>>
    %48 = vector.broadcast %47 : f32 to vector<2x16xf32>
    %49 = arith.addf %46, %48 : vector<2x16xf32>
    %c0_34 = arith.constant 0 : index
    %c0_35 = arith.constant 0 : index
    %50 = vector.load %arg5[%c0_34, %c0_35] : memref<2x16xf32, #tpu.memory_space<vmem>>, vector<2x16xf32>
    tpu.vector_store %arg5[%c0_34, %c0_35], %49 {strides = array<i32>} : memref<2x16xf32, #tpu.memory_space<vmem>>, vector<2x16xf32>,
    return
  }
  func.func @transform_0(%arg0: i32, %arg1: i32) -> (i32, i32, i32) {
    %c0_i32 = arith.constant 0 : i32
    %c0_i32_0 = arith.constant 0 : i32
    return %arg0, %c0_i32, %arg1 : i32, i32, i32
  }
  func.func @transform_1(%arg0: i32, %arg1: i32) -> (i32, i32) {
    %c0_i32 = arith.constant 0 : i32
    %c0_i32_0 = arith.constant 0 : i32
    %c0_i32_1 = arith.constant 0 : i32
    return %c0_i32, %c0_i32_0 : i32, i32
  }
  func.func @transform_2(%arg0: i32, %arg1: i32) -> (i32, i32) {
    %c0_i32 = arith.constant 0 : i32
    %c0_i32_0 = arith.constant 0 : i32
    %c0_i32_1 = arith.constant 0 : i32
    return %c0_i32, %c0_i32_0 : i32, i32
  }
  func.func @transform_3(%arg0: i32, %arg1: i32) -> (i32, i32) {
    %c0_i32 = arith.constant 0 : i32
    return %arg0, %arg1 : i32, i32
  }
}

</mosaic_0001>

<llo_original>
// kernel: tpu_custom_call.1
$region0: #{tpu_custom_call.1}
  #allocation0 [shape = 'u32[]', space=smem, size = 0x4, offset = 0x4, fixed_abs, tag = 'smem constant byte address 0x4 - core index']
  #allocation1 [shape = 'u32[144,128]{1,0:T(1,128)}', space=vmem, size = 0x12000, scoped, tag = 'internal scratch']
  #allocation2 [shape = 'f32[1,1]{1,0:T(1,128)S(6)}', space=smem, size = 0x200, scoped, tag = 'scoped memory for tpu_custom_call.1']
  %s0 = inlined_call_operand.hbm [shape: f32[2,8,16], index: 0, kind: input, shape index: {}]
  %s1 = inlined_call_operand.vmem [shape: f32[1,8], index: 1, kind: input, shape index: {}]
  %s2 = inlined_call_operand.<no memory space> [shape: f32[1,1], index: 2, kind: input, shape index: {}]
  %s3 = inlined_call_operand.hbm [shape: f32[2,16], index: 3, kind: output, shape index: {}]
  %s4 = sld [smem:[#allocation0]]
  $region30: #{tpu_custom_call.1} parent=0
    _
  %s6 = ssub.s32 1, %s4
  %s7 = scalar_select 0, %s6, %s4
  %8 = sst [smem:[#allocation2]] %s2
  $region1: #{tpu_custom_call.1} parent=0
    #allocation3 [shape = 'u8[8192]{0}', space=vmem, size = 0x2000, scoped, tag = 'input window, operand 0, single buffered']
    #allocation4 [shape = 's32[1]{0}', space=sflag, size = 0x4, scoped, tag = 'scoped memory for tpu_custom_call.1']
    #allocation5 [shape = 's32[1]{0}', space=sflag, size = 0x4, scoped, tag = 'scoped memory for tpu_custom_call.1']
    #allocation6 [shape = 's32[1]{0}', space=sflag, size = 0x4, scoped, tag = 'scoped memory for tpu_custom_call.1']
    #allocation7 [shape = 'u8[512]{0}', space=smem, size = 0x200, scoped, tag = 'input window, operand 1, single buffered']
    #allocation8 [shape = 'u8[1024]{0}', space=vmem, size = 0x400, scoped, tag = 'output window, operand 0, single buffered']
    %9 = vsyncpa [#allocation4], 0
    %10 = vsyncpa [#allocation6], 0
    %11 = vsyncpa [#allocation5], 0
    // Predicated region
    $region2: #{tpu_custom_call.1} parent=1 // pred_check
      _
    $region3: #{tpu_custom_call.1} parent=1 // pred_check_branch
      %13 = sbr.rel (0) target = $region5
    $region4: #{tpu_custom_call.1} parent=1 // pred_region
      %s15 = ssub.s32 256, 256
      %16 = vsyncadd [#allocation4], %s15
      %s17 = sshll.u32 [#allocation3], 4
      %s18 = int_to_ptr.vmem [resolvable:$true] %s17
      %23 = dma.hbm_to_vmem [thread:$0]  %s0, 256, %s18, [#allocation4], 128, 128, 8
    $region5: #{tpu_custom_call.1} parent=1 // pred_fallthru
      _
    // Predicated region
    $region6: #{tpu_custom_call.1} parent=1 // pred_check
      _
    $region7: #{tpu_custom_call.1} parent=1 // pred_check_branch
      %25 = sbr.rel (0) target = $region9
    $region8: #{tpu_custom_call.1} parent=1 // pred_region
      %s27 = ssub.s32 16, 16
      %28 = vsyncadd [#allocation6], %s27
      %s30 = sshll.u32 %s1, 4
      %s31 = int_to_ptr.vmem [resolvable:$true] %s30
      %33 = dma.vmem_to_smem %s31, 16, [#allocation7], [#allocation6]
    $region9: #{tpu_custom_call.1} parent=1 // pred_fallthru
      _
    // Predicated region
    $region10: #{tpu_custom_call.1} parent=1 // pred_check
      _
    $region11: #{tpu_custom_call.1} parent=1 // pred_check_branch
      %35 = sbr.rel (0) target = $region13
    $region12: #{tpu_custom_call.1} parent=1 // pred_region
      _
    $region13: #{tpu_custom_call.1} parent=1 // pred_fallthru
      _
    // Predicated region
    $region14: #{tpu_custom_call.1} parent=1 // pred_check
      _
    $region15: #{tpu_custom_call.1} parent=1 // pred_check_branch
      %37 = sbr.rel (0) target = $region17
    $region16: #{tpu_custom_call.1} parent=1 // pred_region
      %38 = dma.done [#allocation4], 256
    $region17: #{tpu_custom_call.1} parent=1 // pred_fallthru
      _
    // Predicated region
    $region18: #{tpu_custom_call.1} parent=1 // pred_check
      _
    $region19: #{tpu_custom_call.1} parent=1 // pred_check_branch
      %40 = sbr.rel (0) target = $region21
    $region20: #{tpu_custom_call.1} parent=1 // pred_region
      %41 = dma.done [#allocation6], 16
    $region21: #{tpu_custom_call.1} parent=1 // pred_fallthru
      _
    %42 = sfence
    %v43 = vld [vmem:[#allocation3] sm:$0x1]
    %v44 = vld [vmem:[#allocation3 + $0x8] sm:$0x1]
    %s45 = sld [smem:[#allocation7]]
    %v46 = vstv %s45
    %v47 = vmul.f32 %v43, %v46
    %v48 = vmul.f32 %v44, %v46
    %v49 = vld [vmem:[#allocation3 + $0x1] sm:$0x1]
    %v50 = vld [vmem:[#allocation3 + $0x9] sm:$0x1]
    %s51 = sld [smem:[#allocation7 + $0x1]]
    %v52 = vstv %s51
    %v53 = vmul.f32 %v49, %v52
    %v54 = vmul.f32 %v50, %v52
    %v55 = vadd.f32 %v47, %v53
    %v56 = vadd.f32 %v48, %v54
    %v57 = vld [vmem:[#allocation3 + $0x2] sm:$0x1]
    %v58 = vld [vmem:[#allocation3 + $0xa] sm:$0x1]
    %s59 = sld [smem:[#allocation7 + $0x2]]
    %v60 = vstv %s59
    %v61 = vmul.f32 %v57, %v60
    %v62 = vmul.f32 %v58, %v60
    %v63 = vadd.f32 %v55, %v61
    %v64 = vadd.f32 %v56, %v62
    %v65 = vld [vmem:[#allocation3 + $0x3] sm:$0x1]
    %v66 = vld [vmem:[#allocation3 + $0xb] sm:$0x1]
    %s67 = sld [smem:[#allocation7 + $0x3]]
    %v68 = vstv %s67
    %v69 = vmul.f32 %v65, %v68
    %v70 = vmul.f32 %v66, %v68
    %v71 = vadd.f32 %v63, %v69
    %v72 = vadd.f32 %v64, %v70
    %v73 = vld [vmem:[#allocation3 + $0x4] sm:$0x1]
    %v74 = vld [vmem:[#allocation3 + $0xc] sm:$0x1]
    %s75 = sld [smem:[#allocation7 + $0x4]]
    %v76 = vstv %s75
    %v77 = vmul.f32 %v73, %v76
    %v78 = vmul.f32 %v74, %v76
    %v79 = vadd.f32 %v71, %v77
    %v80 = vadd.f32 %v72, %v78
    %v81 = vld [vmem:[#allocation3 + $0x5] sm:$0x1]
    %v82 = vld [vmem:[#allocation3 + $0xd] sm:$0x1]
    %s83 = sld [smem:[#allocation7 + $0x5]]
    %v84 = vstv %s83
    %v85 = vmul.f32 %v81, %v84
    %v86 = vmul.f32 %v82, %v84
    %v87 = vadd.f32 %v79, %v85
    %v88 = vadd.f32 %v80, %v86
    %v89 = vld [vmem:[#allocation3 + $0x6] sm:$0x1]
    %v90 = vld [vmem:[#allocation3 + $0xe] sm:$0x1]
    %s91 = sld [smem:[#allocation7 + $0x6]]
    %v92 = vstv %s91
    %v93 = vmul.f32 %v89, %v92
    %v94 = vmul.f32 %v90, %v92
    %v95 = vadd.f32 %v87, %v93
    %v96 = vadd.f32 %v88, %v94
    %v97 = vld [vmem:[#allocation3 + $0x7] sm:$0x1]
    %v98 = vld [vmem:[#allocation3 + $0xf] sm:$0x1]
    %s99 = sld [smem:[#allocation7 + $0x7]]
    %v100 = vstv %s99
    %v101 = vmul.f32 %v97, %v100
    %v102 = vmul.f32 %v98, %v100
    %v103 = vadd.f32 %v95, %v101
    %v104 = vadd.f32 %v96, %v102
    %s105 = sld [smem:[#allocation2]]
    %v106 = vstv %s105
    %v107 = vadd.f32 %v103, %v106
    %v108 = vadd.f32 %v104, %v106
    %v111 = vrot.slane %v108, 7
    %vm112 = vcmask 1041409
    %v113 = vsel %vm112, %v111, %v107
    %vm115 = vcmask 123904
    %116 = vst.msk [vmem:[#allocation8] sm:$0x3] %vm115, %v113
    // Predicated region
    $region22: #{tpu_custom_call.1} parent=1 // pred_check
      _
    $region23: #{tpu_custom_call.1} parent=1 // pred_check_branch
      %118 = sbr.rel (0) target = $region25
    $region24: #{tpu_custom_call.1} parent=1 // pred_region
      %s120 = ssub.s32 32, 32
      %121 = vsyncadd [#allocation5], %s120
      %s123 = sshll.u32 [#allocation8], 4
      %s124 = int_to_ptr.vmem [resolvable:$true] %s123
      %126 = dma.vmem_to_hbm [thread:$0]  %s124, 32, %s3, [#allocation5]
    $region25: #{tpu_custom_call.1} parent=1 // pred_fallthru
      _
    // Predicated region
    $region26: #{tpu_custom_call.1} parent=1 // pred_check
      _
    $region27: #{tpu_custom_call.1} parent=1 // pred_check_branch
      %128 = sbr.rel (0) target = $region29
    $region28: #{tpu_custom_call.1} parent=1 // pred_region
      %129 = dma.done [#allocation5], 32
    $region29: #{tpu_custom_call.1} parent=1 // pred_fallthru
      _
    %130 = vsyncpa [#allocation4], 1
    %131 = vsyncpa [#allocation5], 1
    %132 = vsyncpa [#allocation6], 1

</llo_original>
